<compile_context>
chip_gen: v5e
topology: v5e:2x2
jax: 0.10.0
libtpu: 0.0.40
codegen_flags: <defaults>
</compile_context>

<pallas_src>
import functools
import math

import jax
import jax.numpy as jnp
from jax.experimental import pallas as pl
from jax.experimental.pallas import tpu as pltpu


def adjacency_kernel(
    x_ref,                               # (TB, A, Din)  TB (seq,batch) groups
    vt_ref,                              # (1, H)        value token
    we_ref, be_ref,                      # embed Linear
    wqkv_ref, bqkv_ref,                  # fused Q|K|V projection (H, 3H)
    wo_ref, bo_ref,                      # attention output projection
    w1_ref, b1_ref, w2_ref, b2_ref,      # attention position-wise FFN
    wf1_ref, bf1_ref, wf2_ref, bf2_ref,  # feedforward_model (H -> H -> A^2)
    out_ref,                             # (TB, A, A^2)  Bernoulli logits
    *, tokens_pad, use_bf16,
):
    TB, A, Din = x_ref.shape
    H = we_ref.shape[1]
    T = tokens_pad                        # padded token count per group (>=8)
    A2 = A * A
    scale = 1.0 / math.sqrt(H)

    def mm(a, b):                         # row-wise matmul on the MXU
        if use_bf16:
            a = a.astype(jnp.bfloat16)
            b = b.astype(jnp.bfloat16)
        return jnp.dot(a, b, preferred_element_type=jnp.float32)

    def bmm(spec, a, b):                  # batched (over TB) matmul
        if use_bf16:
            a = a.astype(jnp.bfloat16)
            b = b.astype(jnp.bfloat16)
        return jnp.einsum(spec, a, b, preferred_element_type=jnp.float32)

    # ---- embed + ReLU over all TB*A agent rows at once ---------------------
    x = x_ref[...].reshape(TB * A, Din)
    e = jnp.maximum(mm(x, we_ref[...]) + be_ref[...], 0.0)          # (TB*A, H)

    # ---- token buffer, padded to T sublanes per group ----------------------
    # rows [0, A) = agent embeds, row A = value token, rows (A, T) = zero pad.
    parts = [e.reshape(TB, A, H),
             jnp.broadcast_to(vt_ref[...].reshape(1, 1, H), (TB, 1, H))]
    if T - A - 1 > 0:
        parts.append(jnp.zeros((TB, T - A - 1, H), jnp.float32))
    tokens = jnp.concatenate(parts, axis=1)                          # (TB, T, H)
    tok2 = tokens.reshape(TB * T, H)

    # ---- fused QKV projection: one (H, 3H) matmul --------------------------
    qkv = mm(tok2, wqkv_ref[...]) + bqkv_ref[...]                    # (TB*T, 3H)
    q = qkv[:, 0 * H:1 * H].reshape(TB, T, H)
    k = qkv[:, 1 * H:2 * H].reshape(TB, T, H)
    v = qkv[:, 2 * H:3 * H].reshape(TB, T, H)

    # ---- batched single-head self-attention (norm = Identity) --------------
    scores = bmm('bqh,bkh->bqk', q, k) * scale                       # (TB, T, T)
    key_id = jax.lax.broadcasted_iota(jnp.int32, (TB, T, T), 2)
    scores = jnp.where(key_id <= A, scores, -1e30)                   # mask pads
    scores = scores - jnp.max(scores, axis=-1, keepdims=True)
    p = jnp.exp(scores)
    attn = p / jnp.sum(p, axis=-1, keepdims=True)

    o = bmm('bqk,bkh->bqh', attn, v).reshape(TB * T, H)              # (TB*T, H)
    o = mm(o, wo_ref[...]) + bo_ref[...]
    h1 = tok2 + o                                                    # residual

    ff = jnp.maximum(mm(h1, w1_ref[...]) + b1_ref[...], 0.0)
    ff = mm(ff, w2_ref[...]) + b2_ref[...]
    h2 = h1 + ff                                                     # residual

    # ---- ReLU + feedforward_model (computed over padded rows too; the pad
    #      rows are negligible filler and get sliced off before the store) ---
    a_out = jnp.maximum(h2, 0.0)                                     # (TB*T, H)
    f = jnp.maximum(mm(a_out, wf1_ref[...]) + bf1_ref[...], 0.0)
    logits = mm(f, wf2_ref[...]) + bf2_ref[...]                      # (TB*T, A2)

    # one blocked (TB, A, A2) store per grid step
    out_ref[...] = logits.reshape(TB, T, A2)[:, :A, :]


_WEIGHT_ORDER = ('vt', 'we', 'be', 'wqkv', 'bqkv', 'wo', 'bo',
                 'w1', 'b1', 'w2', 'b2', 'wf1', 'bf1', 'wf2', 'bf2')


def _fuse_qkv(params):
    fused = dict(params)
    fused['wqkv'] = jnp.concatenate(
        [params['wq'], params['wk'], params['wv']], axis=1)
    fused['bqkv'] = jnp.concatenate(
        [params['bq'], params['bk'], params['bv']], axis=1)
    return fused


def _full_spec(p):
    nd = p.ndim
    return pl.BlockSpec(p.shape, lambda i, _nd=nd: (0,) * _nd)


def adjacency_logits_all(state_features, params, *, tb=None, use_bf16_mxu=False):
    """Adjacency logits for ALL (seq, batch) groups: returns (S*B, A, A^2)."""
    S, B, A, Din = state_features.shape
    SB = S * B
    A2 = A * A
    T = max(8, ((A + 1 + 7) // 8) * 8)          # padded token count per group

    x = state_features.reshape(SB, A, Din).astype(jnp.float32)

    # groups per grid step: one big step if it fits, otherwise a sublane-
    # aligned (multiple of 8) block so the output BlockSpec tiles cleanly.
    if tb is None:
        tb = min(SB, 256)
    tb = max(1, min(tb, SB))
    if tb < SB:
        tb = max(8, (tb // 8) * 8)
    nsteps = pl.cdiv(SB, tb)
    sb_pad = nsteps * tb
    if sb_pad != SB:
        x = jnp.concatenate(
            [x, jnp.zeros((sb_pad - SB, A, Din), jnp.float32)], axis=0)

    fused = _fuse_qkv(params)
    weights = [fused[k].astype(jnp.float32) for k in _WEIGHT_ORDER]

    kernel = functools.partial(
        adjacency_kernel, tokens_pad=T, use_bf16=use_bf16_mxu)

    out = pl.pallas_call(
        kernel,
        out_shape=jax.ShapeDtypeStruct((sb_pad, A, A2), jnp.float32),
        grid=(nsteps,),
        in_specs=[pl.BlockSpec((tb, A, Din), lambda i: (i, 0, 0))]
                 + [_full_spec(w) for w in weights],
        out_specs=pl.BlockSpec((tb, A, A2), lambda i: (i, 0, 0)),
        compiler_params=pltpu.CompilerParams(
            dimension_semantics=("parallel",)),   # v7x: both TCs share steps
    )(x, *weights)

    return out[:SB]


def adjacency_forward(state_features, params, *, use_bf16_mxu=False):
    """Mirrors AdjacencyModel.forward: the torch module keeps only group 0
    (`feedforward_model(attn_embeds)[0]`), so only that (seq, batch) group is
    computed.  Returns (logits, probs) of Independent(Bernoulli(logits), 1)."""
    first = state_features[:1, :1]                                  # group 0
    logits = adjacency_logits_all(first, params,
                                  use_bf16_mxu=use_bf16_mxu)[0]     # (A, A^2)
    return logits, jax.nn.sigmoid(logits)


def init_params(key, in_dim, hidden_dim, agents_num):
    """Deterministic torch-Linear-style init (uniform +/- 1/sqrt(fan_in))."""
    keys = jax.random.split(key, 10)

    def linear(k, fan_in, fan_out):
        bound = 1.0 / math.sqrt(fan_in)
        kw, kb = jax.random.split(k)
        w = jax.random.uniform(kw, (fan_in, fan_out), jnp.float32, -bound, bound)
        b = jax.random.uniform(kb, (1, fan_out), jnp.float32, -bound, bound)
        return w, b

    p = {'vt': jnp.zeros((1, hidden_dim), jnp.float32)}   # value_token = zeros
    p['we'], p['be'] = linear(keys[0], in_dim, hidden_dim)
    p['wq'], p['bq'] = linear(keys[1], hidden_dim, hidden_dim)
    p['wk'], p['bk'] = linear(keys[2], hidden_dim, hidden_dim)
    p['wv'], p['bv'] = linear(keys[3], hidden_dim, hidden_dim)
    p['wo'], p['bo'] = linear(keys[4], hidden_dim, hidden_dim)
    p['w1'], p['b1'] = linear(keys[5], hidden_dim, hidden_dim)
    p['w2'], p['b2'] = linear(keys[6], hidden_dim, hidden_dim)
    p['wf1'], p['bf1'] = linear(keys[7], hidden_dim, hidden_dim)
    p['wf2'], p['bf2'] = linear(keys[8], hidden_dim, agents_num * agents_num)
    return p


def reference_forward_all(state_features, p):
    """Plain-JAX reference (value token prepended, row 0 dropped) — all groups."""
    S, B, A, Din = state_features.shape
    H = p['we'].shape[1]
    x = state_features.reshape(S * B, A, Din).astype(jnp.float32)
    e = jax.nn.relu(x @ p['we'] + p['be'])
    vt = jnp.broadcast_to(p['vt'][None, :, :], (S * B, 1, H))
    tok = jnp.concatenate([vt, e], axis=1)
    q = tok @ p['wq'] + p['bq']
    k = tok @ p['wk'] + p['bk']
    v = tok @ p['wv'] + p['bv']
    s = jnp.einsum('bqh,bkh->bqk', q, k) / math.sqrt(H)
    a = jax.nn.softmax(s, axis=-1)
    o = jnp.einsum('bqk,bkh->bqh', a, v) @ p['wo'] + p['bo']
    h1 = tok + o
    ff = jax.nn.relu(h1 @ p['w1'] + p['b1']) @ p['w2'] + p['b2']
    h2 = h1 + ff
    attn_out = jax.nn.relu(h2[:, 1:, :])
    f = jax.nn.relu(attn_out @ p['wf1'] + p['bf1']) @ p['wf2'] + p['bf2']
    return f                                          # (SB, A, A^2)


if __name__ == "__main__":
    seq_len, batch, n_agents, in_dim, hidden_dim = 2, 2, 4, 16, 32

    key = jax.random.PRNGKey(0)
    k_params, k_x, k_x2 = jax.random.split(key, 3)
    params = init_params(k_params, in_dim, hidden_dim, n_agents)
    state_features = jax.random.normal(
        k_x, (seq_len, batch, n_agents, in_dim), jnp.float32)

    ref_all = reference_forward_all(state_features, params)

    # 1) module-faithful forward: only group 0 is computed (no discarded work)
    logits, probs = adjacency_forward(state_features, params)
    logits = jax.block_until_ready(logits)
    probs = jax.block_until_ready(probs)
    assert logits.shape == (n_agents, n_agents * n_agents)
    assert jnp.allclose(logits, ref_all[0], atol=2e-4, rtol=2e-4), (
        float(jnp.max(jnp.abs(logits - ref_all[0]))))

    # 2) full-batch API: all SB groups in a single batched grid step
    all_logits = jax.block_until_ready(
        adjacency_logits_all(state_features, params))
    assert all_logits.shape == (seq_len * batch, n_agents, n_agents * n_agents)
    assert jnp.allclose(all_logits, ref_all, atol=2e-4, rtol=2e-4), (
        float(jnp.max(jnp.abs(all_logits - ref_all))))

    # 3) multi-step grid + SB padding path (SB=10, tb=8 -> 2 steps, pad to 16)
    sf2 = jax.random.normal(k_x2, (5, 2, n_agents, in_dim), jnp.float32)
    all2 = jax.block_until_ready(adjacency_logits_all(sf2, params, tb=8))
    ref2 = reference_forward_all(sf2, params)
    assert jnp.allclose(all2, ref2, atol=2e-4, rtol=2e-4), (
        float(jnp.max(jnp.abs(all2 - ref2))))

    # 4) bf16-MXU variant (v6e / v7x), f32 accumulation — loose tolerance
    all_bf16 = jax.block_until_ready(
        adjacency_logits_all(state_features, params, use_bf16_mxu=True))
    assert bool(jnp.all(jnp.isfinite(all_bf16)))
    assert float(jnp.max(jnp.abs(all_bf16 - ref_all))) < 0.5

    print("KERNEL_OK")
</pallas_src>

<mosaic_0001>
module attributes {stable_mosaic.version = 11 : i64} {
  func.func @adjacency_kernel(%arg0: i32, %arg1: memref<1x4x16xf32, #tpu.memory_space<vmem>>, %arg2: memref<1x32xf32, #tpu.memory_space<vmem>>, %arg3: memref<16x32xf32, #tpu.memory_space<vmem>>, %arg4: memref<1x32xf32, #tpu.memory_space<vmem>>, %arg5: memref<32x96xf32, #tpu.memory_space<vmem>>, %arg6: memref<1x96xf32, #tpu.memory_space<vmem>>, %arg7: memref<32x32xf32, #tpu.memory_space<vmem>>, %arg8: memref<1x32xf32, #tpu.memory_space<vmem>>, %arg9: memref<32x32xf32, #tpu.memory_space<vmem>>, %arg10: memref<1x32xf32, #tpu.memory_space<vmem>>, %arg11: memref<32x32xf32, #tpu.memory_space<vmem>>, %arg12: memref<1x32xf32, #tpu.memory_space<vmem>>, %arg13: memref<32x32xf32, #tpu.memory_space<vmem>>, %arg14: memref<1x32xf32, #tpu.memory_space<vmem>>, %arg15: memref<32x16xf32, #tpu.memory_space<vmem>>, %arg16: memref<1x16xf32, #tpu.memory_space<vmem>>, %arg17: memref<1x4x16xf32, #tpu.memory_space<vmem>>) attributes {dimension_semantics = [#tpu.dimension_semantics<parallel>], iteration_bounds = array<i64: 1>, scalar_prefetch = 0 : i64, scratch_operands = 0 : i64, tpu.core_type = #tpu.core_type<tc>, window_params = [{transform_indices = @transform_0, window_bounds = array<i64: 1, 4, 16>}, {pipeline_mode = #tpu.pipeline_mode<synchronous>, transform_indices = @transform_1, window_bounds = array<i64: 1, 32>}, {pipeline_mode = #tpu.pipeline_mode<synchronous>, transform_indices = @transform_2, window_bounds = array<i64: 16, 32>}, {pipeline_mode = #tpu.pipeline_mode<synchronous>, transform_indices = @transform_3, window_bounds = array<i64: 1, 32>}, {pipeline_mode = #tpu.pipeline_mode<synchronous>, transform_indices = @transform_4, window_bounds = array<i64: 32, 96>}, {pipeline_mode = #tpu.pipeline_mode<synchronous>, transform_indices = @transform_5, window_bounds = array<i64: 1, 96>}, {pipeline_mode = #tpu.pipeline_mode<synchronous>, transform_indices = @transform_6, window_bounds = array<i64: 32, 32>}, {pipeline_mode = #tpu.pipeline_mode<synchronous>, transform_indices = @transform_7, window_bounds = array<i64: 1, 32>}, {pipeline_mode = #tpu.pipeline_mode<synchronous>, transform_indices = @transform_8, window_bounds = array<i64: 32, 32>}, {pipeline_mode = #tpu.pipeline_mode<synchronous>, transform_indices = @transform_9, window_bounds = array<i64: 1, 32>}, {pipeline_mode = #tpu.pipeline_mode<synchronous>, transform_indices = @transform_10, window_bounds = array<i64: 32, 32>}, {pipeline_mode = #tpu.pipeline_mode<synchronous>, transform_indices = @transform_11, window_bounds = array<i64: 1, 32>}, {pipeline_mode = #tpu.pipeline_mode<synchronous>, transform_indices = @transform_12, window_bounds = array<i64: 32, 32>}, {pipeline_mode = #tpu.pipeline_mode<synchronous>, transform_indices = @transform_13, window_bounds = array<i64: 1, 32>}, {pipeline_mode = #tpu.pipeline_mode<synchronous>, transform_indices = @transform_14, window_bounds = array<i64: 32, 16>}, {pipeline_mode = #tpu.pipeline_mode<synchronous>, transform_indices = @transform_15, window_bounds = array<i64: 1, 16>}, {transform_indices = @transform_16, window_bounds = array<i64: 1, 4, 16>}]} {
    %c0 = arith.constant 0 : index
    %c0_0 = arith.constant 0 : index
    %c0_1 = arith.constant 0 : index
    %0 = vector.load %arg1[%c0, %c0_0, %c0_1] : memref<1x4x16xf32, #tpu.memory_space<vmem>>, vector<1x4x16xf32>
    %1 = vector.shape_cast %0 : vector<1x4x16xf32> to vector<4x16xf32>
    %c0_2 = arith.constant 0 : index
    %c0_3 = arith.constant 0 : index
    %2 = vector.load %arg3[%c0_2, %c0_3] : memref<16x32xf32, #tpu.memory_space<vmem>>, vector<16x32xf32>
    %cst = arith.constant dense<0.000000e+00> : vector<4x32xf32>
    %3 = tpu.matmul %1, %2, %cst {dimension_numbers = #tpu.dot_dimension_numbers<[1], [0], [0], [1], [0, 0, 1, 1], [], []>} : vector<4x16xf32>, vector<16x32xf32>, vector<4x32xf32> -> vector<4x32xf32>
    %c0_4 = arith.constant 0 : index
    %c0_5 = arith.constant 0 : index
    %4 = vector.load %arg4[%c0_4, %c0_5] : memref<1x32xf32, #tpu.memory_space<vmem>>, vector<1x32xf32>
    %5 = vector.broadcast %4 : vector<1x32xf32> to vector<4x32xf32>
    %6 = arith.addf %3, %5 : vector<4x32xf32>
    %cst_6 = arith.constant 0.000000e+00 : f32
    %7 = vector.broadcast %cst_6 : f32 to vector<4x32xf32>
    %8 = arith.maximumf %6, %7 : vector<4x32xf32>
    %9 = vector.shape_cast %8 : vector<4x32xf32> to vector<1x4x32xf32>
    %c0_7 = arith.constant 0 : index
    %c0_8 = arith.constant 0 : index
    %10 = vector.load %arg2[%c0_7, %c0_8] : memref<1x32xf32, #tpu.memory_space<vmem>>, vector<1x32xf32>
    %11 = vector.shape_cast %10 : vector<1x32xf32> to vector<1x1x32xf32>
    %cst_9 = arith.constant 0.000000e+00 : f32
    %12 = vector.broadcast %cst_9 : f32 to vector<1x3x32xf32>
    %13 = tpu.concatenate %9, %11, %12 in 1 : vector<1x4x32xf32>, vector<1x1x32xf32>, vector<1x3x32xf32> -> vector<1x8x32xf32>
    %14 = vector.shape_cast %13 : vector<1x8x32xf32> to vector<8x32xf32>
    %c0_10 = arith.constant 0 : index
    %c0_11 = arith.constant 0 : index
    %15 = vector.load %arg5[%c0_10, %c0_11] : memref<32x96xf32, #tpu.memory_space<vmem>>, vector<32x96xf32>
    %cst_12 = arith.constant dense<0.000000e+00> : vector<8x96xf32>
    %16 = tpu.matmul %14, %15, %cst_12 {dimension_numbers = #tpu.dot_dimension_numbers<[1], [0], [0], [1], [0, 0, 1, 1], [], []>} : vector<8x32xf32>, vector<32x96xf32>, vector<8x96xf32> -> vector<8x96xf32>
    %c0_13 = arith.constant 0 : index
    %c0_14 = arith.constant 0 : index
    %17 = vector.load %arg6[%c0_13, %c0_14] : memref<1x96xf32, #tpu.memory_space<vmem>>, vector<1x96xf32>
    %18 = vector.broadcast %17 : vector<1x96xf32> to vector<8x96xf32>
    %19 = arith.addf %16, %18 : vector<8x96xf32>
    %20 = vector.extract_strided_slice %19 {offsets = [0, 0], sizes = [8, 32], strides = [1, 1]} : vector<8x96xf32> to vector<8x32xf32>
    %21 = vector.shape_cast %20 : vector<8x32xf32> to vector<1x8x32xf32>
    %22 = vector.extract_strided_slice %19 {offsets = [0, 32], sizes = [8, 32], strides = [1, 1]} : vector<8x96xf32> to vector<8x32xf32>
    %23 = vector.shape_cast %22 : vector<8x32xf32> to vector<1x8x32xf32>
    %24 = vector.extract_strided_slice %19 {offsets = [0, 64], sizes = [8, 32], strides = [1, 1]} : vector<8x96xf32> to vector<8x32xf32>
    %25 = vector.shape_cast %24 : vector<8x32xf32> to vector<1x8x32xf32>
    "tpu.trace_start"() <{level = 10 : i32, message = "bqh,bkh->bqk"}> : () -> ()
    %cst_15 = arith.constant dense<0.000000e+00> : vector<1x8x8xf32>
    %26 = tpu.matmul %21, %23, %cst_15 {dimension_numbers = #tpu.dot_dimension_numbers<[2], [2], [1], [1], [0, 0, 0, 1, 1, 1], [0], [0]>} : vector<1x8x32xf32>, vector<1x8x32xf32>, vector<1x8x8xf32> -> vector<1x8x8xf32>
    "tpu.trace_stop"() : () -> ()
    %cst_16 = arith.constant 0.176776692 : f32
    %27 = vector.broadcast %cst_16 : f32 to vector<1x8x8xf32>
    %28 = arith.mulf %26, %27 : vector<1x8x8xf32>
    %29 = tpu.iota {dimensions = array<i32: 2>} : vector<1x8x8xi32>
    %c4_i32 = arith.constant 4 : i32
    %30 = vector.broadcast %c4_i32 : i32 to vector<1x8x8xi32>
    %31 = arith.cmpi sle, %29, %30 : vector<1x8x8xi32>
    %cst_17 = arith.constant -1.000000e+30 : f32
    %32 = vector.broadcast %cst_17 : f32 to vector<1x8x8xf32>
    %33 = arith.select %31, %28, %32 : vector<1x8x8xi1>, vector<1x8x8xf32>
    %cst_18 = arith.constant dense<0xFF800000> : vector<1x8xf32>
    %34 = vector.multi_reduction <maximumf>, %33, %cst_18 [2] : vector<1x8x8xf32> to vector<1x8xf32>
    %35 = vector.shape_cast %34 : vector<1x8xf32> to vector<1x8x1xf32>
    %36 = vector.broadcast %35 : vector<1x8x1xf32> to vector<1x8x8xf32>
    %37 = arith.subf %33, %36 : vector<1x8x8xf32>
    %38 = math.exp %37 : vector<1x8x8xf32>
    %cst_19 = arith.constant dense<0.000000e+00> : vector<1x8xf32>
    %39 = vector.multi_reduction <add>, %38, %cst_19 [2] : vector<1x8x8xf32> to vector<1x8xf32>
    %40 = vector.shape_cast %39 : vector<1x8xf32> to vector<1x8x1xf32>
    %41 = vector.broadcast %40 : vector<1x8x1xf32> to vector<1x8x8xf32>
    %42 = arith.divf %38, %41 : vector<1x8x8xf32>
    "tpu.trace_start"() <{level = 10 : i32, message = "bqk,bkh->bqh"}> : () -> ()
    %cst_20 = arith.constant dense<0.000000e+00> : vector<1x8x32xf32>
    %43 = tpu.matmul %42, %25, %cst_20 {dimension_numbers = #tpu.dot_dimension_numbers<[2], [1], [1], [2], [0, 0, 0, 1, 1, 2], [0], [0]>} : vector<1x8x8xf32>, vector<1x8x32xf32>, vector<1x8x32xf32> -> vector<1x8x32xf32>
    "tpu.trace_stop"() : () -> ()
    %44 = vector.shape_cast %43 : vector<1x8x32xf32> to vector<8x32xf32>
    %c0_21 = arith.constant 0 : index
    %c0_22 = arith.constant 0 : index
    %45 = vector.load %arg7[%c0_21, %c0_22] : memref<32x32xf32, #tpu.memory_space<vmem>>, vector<32x32xf32>
    %cst_23 = arith.constant dense<0.000000e+00> : vector<8x32xf32>
    %46 = tpu.matmul %44, %45, %cst_23 {dimension_numbers = #tpu.dot_dimension_numbers<[1], [0], [0], [1], [0, 0, 1, 1], [], []>} : vector<8x32xf32>, vector<32x32xf32>, vector<8x32xf32> -> vector<8x32xf32>
    %c0_24 = arith.constant 0 : index
    %c0_25 = arith.constant 0 : index
    %47 = vector.load %arg8[%c0_24, %c0_25] : memref<1x32xf32, #tpu.memory_space<vmem>>, vector<1x32xf32>
    %48 = vector.broadcast %47 : vector<1x32xf32> to vector<8x32xf32>
    %49 = arith.addf %46, %48 : vector<8x32xf32>
    %50 = arith.addf %14, %49 : vector<8x32xf32>
    %c0_26 = arith.constant 0 : index
    %c0_27 = arith.constant 0 : index
    %51 = vector.load %arg9[%c0_26, %c0_27] : memref<32x32xf32, #tpu.memory_space<vmem>>, vector<32x32xf32>
    %cst_28 = arith.constant dense<0.000000e+00> : vector<8x32xf32>
    %52 = tpu.matmul %50, %51, %cst_28 {dimension_numbers = #tpu.dot_dimension_numbers<[1], [0], [0], [1], [0, 0, 1, 1], [], []>} : vector<8x32xf32>, vector<32x32xf32>, vector<8x32xf32> -> vector<8x32xf32>
    %c0_29 = arith.constant 0 : index
    %c0_30 = arith.constant 0 : index
    %53 = vector.load %arg10[%c0_29, %c0_30] : memref<1x32xf32, #tpu.memory_space<vmem>>, vector<1x32xf32>
    %54 = vector.broadcast %53 : vector<1x32xf32> to vector<8x32xf32>
    %55 = arith.addf %52, %54 : vector<8x32xf32>
    %cst_31 = arith.constant 0.000000e+00 : f32
    %56 = vector.broadcast %cst_31 : f32 to vector<8x32xf32>
    %57 = arith.maximumf %55, %56 : vector<8x32xf32>
    %c0_32 = arith.constant 0 : index
    %c0_33 = arith.constant 0 : index
    %58 = vector.load %arg11[%c0_32, %c0_33] : memref<32x32xf32, #tpu.memory_space<vmem>>, vector<32x32xf32>
    %cst_34 = arith.constant dense<0.000000e+00> : vector<8x32xf32>
    %59 = tpu.matmul %57, %58, %cst_34 {dimension_numbers = #tpu.dot_dimension_numbers<[1], [0], [0], [1], [0, 0, 1, 1], [], []>} : vector<8x32xf32>, vector<32x32xf32>, vector<8x32xf32> -> vector<8x32xf32>
    %c0_35 = arith.constant 0 : index
    %c0_36 = arith.constant 0 : index
    %60 = vector.load %arg12[%c0_35, %c0_36] : memref<1x32xf32, #tpu.memory_space<vmem>>, vector<1x32xf32>
    %61 = vector.broadcast %60 : vector<1x32xf32> to vector<8x32xf32>
    %62 = arith.addf %59, %61 : vector<8x32xf32>
    %63 = arith.addf %50, %62 : vector<8x32xf32>
    %cst_37 = arith.constant 0.000000e+00 : f32
    %64 = vector.broadcast %cst_37 : f32 to vector<8x32xf32>
    %65 = arith.maximumf %63, %64 : vector<8x32xf32>
    %c0_38 = arith.constant 0 : index
    %c0_39 = arith.constant 0 : index
    %66 = vector.load %arg13[%c0_38, %c0_39] : memref<32x32xf32, #tpu.memory_space<vmem>>, vector<32x32xf32>
    %cst_40 = arith.constant dense<0.000000e+00> : vector<8x32xf32>
    %67 = tpu.matmul %65, %66, %cst_40 {dimension_numbers = #tpu.dot_dimension_numbers<[1], [0], [0], [1], [0, 0, 1, 1], [], []>} : vector<8x32xf32>, vector<32x32xf32>, vector<8x32xf32> -> vector<8x32xf32>
    %c0_41 = arith.constant 0 : index
    %c0_42 = arith.constant 0 : index
    %68 = vector.load %arg14[%c0_41, %c0_42] : memref<1x32xf32, #tpu.memory_space<vmem>>, vector<1x32xf32>
    %69 = vector.broadcast %68 : vector<1x32xf32> to vector<8x32xf32>
    %70 = arith.addf %67, %69 : vector<8x32xf32>
    %cst_43 = arith.constant 0.000000e+00 : f32
    %71 = vector.broadcast %cst_43 : f32 to vector<8x32xf32>
    %72 = arith.maximumf %70, %71 : vector<8x32xf32>
    %c0_44 = arith.constant 0 : index
    %c0_45 = arith.constant 0 : index
    %73 = vector.load %arg15[%c0_44, %c0_45] : memref<32x16xf32, #tpu.memory_space<vmem>>, vector<32x16xf32>
    %cst_46 = arith.constant dense<0.000000e+00> : vector<8x16xf32>
    %74 = tpu.matmul %72, %73, %cst_46 {dimension_numbers = #tpu.dot_dimension_numbers<[1], [0], [0], [1], [0, 0, 1, 1], [], []>} : vector<8x32xf32>, vector<32x16xf32>, vector<8x16xf32> -> vector<8x16xf32>
    %c0_47 = arith.constant 0 : index
    %c0_48 = arith.constant 0 : index
    %75 = vector.load %arg16[%c0_47, %c0_48] : memref<1x16xf32, #tpu.memory_space<vmem>>, vector<1x16xf32>
    %76 = vector.broadcast %75 : vector<1x16xf32> to vector<8x16xf32>
    %77 = arith.addf %74, %76 : vector<8x16xf32>
    %78 = vector.shape_cast %77 : vector<8x16xf32> to vector<1x8x16xf32>
    %79 = vector.extract_strided_slice %78 {offsets = [0, 0, 0], sizes = [1, 4, 16], strides = [1, 1, 1]} : vector<1x8x16xf32> to vector<1x4x16xf32>
    %c0_49 = arith.constant 0 : index
    %c0_50 = arith.constant 0 : index
    %c0_51 = arith.constant 0 : index
    %80 = vector.load %arg17[%c0_49, %c0_50, %c0_51] : memref<1x4x16xf32, #tpu.memory_space<vmem>>, vector<1x4x16xf32>
    tpu.vector_store %arg17[%c0_49, %c0_50, %c0_51], %79 {strides = array<i32>} : memref<1x4x16xf32, #tpu.memory_space<vmem>>, vector<1x4x16xf32>,
    return
  }
  func.func @transform_0(%arg0: i32) -> (i32, i32, i32) {
    %c0_i32 = arith.constant 0 : i32
    %c0_i32_0 = arith.constant 0 : i32
    %c0_i32_1 = arith.constant 0 : i32
    return %arg0, %c0_i32, %c0_i32_0 : i32, i32, i32
  }
  func.func @transform_1(%arg0: i32) -> (i32, i32) {
    %c0_i32 = arith.constant 0 : i32
    %c0_i32_0 = arith.constant 0 : i32
    %c0_i32_1 = arith.constant 0 : i32
    return %c0_i32, %c0_i32_0 : i32, i32
  }
  func.func @transform_2(%arg0: i32) -> (i32, i32) {
    %c0_i32 = arith.constant 0 : i32
    %c0_i32_0 = arith.constant 0 : i32
    %c0_i32_1 = arith.constant 0 : i32
    return %c0_i32, %c0_i32_0 : i32, i32
  }
  func.func @transform_3(%arg0: i32) -> (i32, i32) {
    %c0_i32 = arith.constant 0 : i32
    %c0_i32_0 = arith.constant 0 : i32
    %c0_i32_1 = arith.constant 0 : i32
    return %c0_i32, %c0_i32_0 : i32, i32
  }
  func.func @transform_4(%arg0: i32) -> (i32, i32) {
    %c0_i32 = arith.constant 0 : i32
    %c0_i32_0 = arith.constant 0 : i32
    %c0_i32_1 = arith.constant 0 : i32
    return %c0_i32, %c0_i32_0 : i32, i32
  }
  func.func @transform_5(%arg0: i32) -> (i32, i32) {
    %c0_i32 = arith.constant 0 : i32
    %c0_i32_0 = arith.constant 0 : i32
    %c0_i32_1 = arith.constant 0 : i32
    return %c0_i32, %c0_i32_0 : i32, i32
  }
  func.func @transform_6(%arg0: i32) -> (i32, i32) {
    %c0_i32 = arith.constant 0 : i32
    %c0_i32_0 = arith.constant 0 : i32
    %c0_i32_1 = arith.constant 0 : i32
    return %c0_i32, %c0_i32_0 : i32, i32
  }
  func.func @transform_7(%arg0: i32) -> (i32, i32) {
    %c0_i32 = arith.constant 0 : i32
    %c0_i32_0 = arith.constant 0 : i32
    %c0_i32_1 = arith.constant 0 : i32
    return %c0_i32, %c0_i32_0 : i32, i32
  }
  func.func @transform_8(%arg0: i32) -> (i32, i32) {
    %c0_i32 = arith.constant 0 : i32
    %c0_i32_0 = arith.constant 0 : i32
    %c0_i32_1 = arith.constant 0 : i32
    return %c0_i32, %c0_i32_0 : i32, i32
  }
  func.func @transform_9(%arg0: i32) -> (i32, i32) {
    %c0_i32 = arith.constant 0 : i32
    %c0_i32_0 = arith.constant 0 : i32
    %c0_i32_1 = arith.constant 0 : i32
    return %c0_i32, %c0_i32_0 : i32, i32
  }
  func.func @transform_10(%arg0: i32) -> (i32, i32) {
    %c0_i32 = arith.constant 0 : i32
    %c0_i32_0 = arith.constant 0 : i32
    %c0_i32_1 = arith.constant 0 : i32
    return %c0_i32, %c0_i32_0 : i32, i32
  }
  func.func @transform_11(%arg0: i32) -> (i32, i32) {
    %c0_i32 = arith.constant 0 : i32
    %c0_i32_0 = arith.constant 0 : i32
    %c0_i32_1 = arith.constant 0 : i32
    return %c0_i32, %c0_i32_0 : i32, i32
  }
  func.func @transform_12(%arg0: i32) -> (i32, i32) {
    %c0_i32 = arith.constant 0 : i32
    %c0_i32_0 = arith.constant 0 : i32
    %c0_i32_1 = arith.constant 0 : i32
    return %c0_i32, %c0_i32_0 : i32, i32
  }
  func.func @transform_13(%arg0: i32) -> (i32, i32) {
    %c0_i32 = arith.constant 0 : i32
    %c0_i32_0 = arith.constant 0 : i32
    %c0_i32_1 = arith.constant 0 : i32
    return %c0_i32, %c0_i32_0 : i32, i32
  }
  func.func @transform_14(%arg0: i32) -> (i32, i32) {
    %c0_i32 = arith.constant 0 : i32
    %c0_i32_0 = arith.constant 0 : i32
    %c0_i32_1 = arith.constant 0 : i32
    return %c0_i32, %c0_i32_0 : i32, i32
  }
  func.func @transform_15(%arg0: i32) -> (i32, i32) {
    %c0_i32 = arith.constant 0 : i32
    %c0_i32_0 = arith.constant 0 : i32
    %c0_i32_1 = arith.constant 0 : i32
    return %c0_i32, %c0_i32_0 : i32, i32
  }
  func.func @transform_16(%arg0: i32) -> (i32, i32, i32) {
    %c0_i32 = arith.constant 0 : i32
    %c0_i32_0 = arith.constant 0 : i32
    %c0_i32_1 = arith.constant 0 : i32
    return %arg0, %c0_i32, %c0_i32_0 : i32, i32, i32
  }
}

</mosaic_0001>

<llo_original>
// kernel: tpu_custom_call.1
$region0: #{tpu_custom_call.1}
  #allocation0 [shape = 'u32[]', space=smem, size = 0x4, offset = 0x4, fixed_abs, tag = 'smem constant byte address 0x4 - core index']
  #allocation1 [shape = 'u32[72,128]{1,0:T(1,128)}', space=vmem, size = 0x9000, scoped, tag = 'internal scratch']
  %s0 = inlined_call_operand.hbm [shape: f32[1,4,16], index: 0, kind: input, shape index: {}]
  %s1 = inlined_call_operand.vmem [shape: f32[1,32], index: 1, kind: input, shape index: {}]
  %s2 = inlined_call_operand.vmem [shape: f32[16,32], index: 2, kind: input, shape index: {}]
  %s3 = inlined_call_operand.vmem [shape: f32[1,32], index: 3, kind: input, shape index: {}]
  %s4 = inlined_call_operand.vmem [shape: f32[32,96], index: 4, kind: input, shape index: {}]
  %s5 = inlined_call_operand.vmem [shape: f32[1,96], index: 5, kind: input, shape index: {}]
  %s6 = inlined_call_operand.hbm [shape: f32[32,32], index: 6, kind: input, shape index: {}]
  %s7 = inlined_call_operand.vmem [shape: f32[1,32], index: 7, kind: input, shape index: {}]
  %s8 = inlined_call_operand.hbm [shape: f32[32,32], index: 8, kind: input, shape index: {}]
  %s9 = inlined_call_operand.vmem [shape: f32[1,32], index: 9, kind: input, shape index: {}]
  %s10 = inlined_call_operand.hbm [shape: f32[32,32], index: 10, kind: input, shape index: {}]
  %s11 = inlined_call_operand.vmem [shape: f32[1,32], index: 11, kind: input, shape index: {}]
  %s12 = inlined_call_operand.hbm [shape: f32[32,32], index: 12, kind: input, shape index: {}]
  %s13 = inlined_call_operand.vmem [shape: f32[1,32], index: 13, kind: input, shape index: {}]
  %s14 = inlined_call_operand.vmem [shape: f32[32,16], index: 14, kind: input, shape index: {}]
  %s15 = inlined_call_operand.vmem [shape: f32[1,16], index: 15, kind: input, shape index: {}]
  %s16 = inlined_call_operand.hbm [shape: f32[1,4,16], index: 16, kind: output, shape index: {}]
  %s17 = sld [smem:[#allocation0]]
  $region94: #{tpu_custom_call.1} parent=0
    _
  %s19 = ssub.s32 1, %s17
  %s20 = scalar_select 0, %s19, %s17
  $region1: #{tpu_custom_call.1} parent=0
    #allocation2 [shape = 'u8[2048]{0}', space=vmem, size = 0x800, scoped, tag = 'input window, operand 0, single buffered']
    #allocation3 [shape = 's32[1]{0}', space=sflag, size = 0x4, scoped, tag = 'scoped memory for tpu_custom_call.1']
    #allocation4 [shape = 's32[1]{0}', space=sflag, size = 0x4, scoped, tag = 'scoped memory for tpu_custom_call.1']
    #allocation5 [shape = 'u8[16384]{0}', space=vmem, size = 0x4000, scoped, tag = 'input window, operand 6, single buffered']
    #allocation6 [shape = 's32[1]{0}', space=sflag, size = 0x4, scoped, tag = 'scoped memory for tpu_custom_call.1']
    #allocation7 [shape = 'u8[16384]{0}', space=vmem, size = 0x4000, scoped, tag = 'input window, operand 8, single buffered']
    #allocation8 [shape = 'u8[16384]{0}', space=vmem, size = 0x4000, scoped, tag = 'input window, operand 10, single buffered']
    #allocation9 [shape = 's32[1]{0}', space=sflag, size = 0x4, scoped, tag = 'scoped memory for tpu_custom_call.1']
    #allocation10 [shape = 'u8[16384]{0}', space=vmem, size = 0x4000, scoped, tag = 'input window, operand 12, single buffered']
    #allocation11 [shape = 'u8[2048]{0}', space=vmem, size = 0x800, scoped, tag = 'output window, operand 0, single buffered']
    %21 = vsyncpa [#allocation3], 0
    %22 = vsyncpa [#allocation6], 0
    %23 = vsyncpa [#allocation9], 0
    %24 = vsyncpa [#allocation4], 0
    // Predicated region
    $region2: #{tpu_custom_call.1} parent=1 // pred_check
      _
    $region3: #{tpu_custom_call.1} parent=1 // pred_check_branch
      %26 = sbr.rel (0) target = $region5
    $region4: #{tpu_custom_call.1} parent=1 // pred_region
      %28 = vsyncadd [#allocation3], 0
      %s30 = sshll.u32 %s0, 4
      %s31 = int_to_ptr.hbm [resolvable:$true] %s30
      %s32 = sshll.u32 [#allocation2], 4
      %s33 = int_to_ptr.vmem [resolvable:$true] %s32
      %35 = dma.hbm_to_vmem [thread:$0]  %s31, 64, %s33, [#allocation3]
    $region5: #{tpu_custom_call.1} parent=1 // pred_fallthru
      _
    // Predicated region
    $region6: #{tpu_custom_call.1} parent=1 // pred_check
      _
    $region7: #{tpu_custom_call.1} parent=1 // pred_check_branch
      %37 = sbr.rel (0) target = $region9
    $region8: #{tpu_custom_call.1} parent=1 // pred_region
      _
    $region9: #{tpu_custom_call.1} parent=1 // pred_fallthru
      _
    // Predicated region
    $region10: #{tpu_custom_call.1} parent=1 // pred_check
      _
    $region11: #{tpu_custom_call.1} parent=1 // pred_check_branch
      %39 = sbr.rel (0) target = $region13
    $region12: #{tpu_custom_call.1} parent=1 // pred_region
      _
    $region13: #{tpu_custom_call.1} parent=1 // pred_fallthru
      _
    // Predicated region
    $region14: #{tpu_custom_call.1} parent=1 // pred_check
      _
    $region15: #{tpu_custom_call.1} parent=1 // pred_check_branch
      %41 = sbr.rel (0) target = $region17
    $region16: #{tpu_custom_call.1} parent=1 // pred_region
      _
    $region17: #{tpu_custom_call.1} parent=1 // pred_fallthru
      _
    // Predicated region
    $region18: #{tpu_custom_call.1} parent=1 // pred_check
      _
    $region19: #{tpu_custom_call.1} parent=1 // pred_check_branch
      %43 = sbr.rel (0) target = $region21
    $region20: #{tpu_custom_call.1} parent=1 // pred_region
      _
    $region21: #{tpu_custom_call.1} parent=1 // pred_fallthru
      _
    // Predicated region
    $region22: #{tpu_custom_call.1} parent=1 // pred_check
      _
    $region23: #{tpu_custom_call.1} parent=1 // pred_check_branch
      %45 = sbr.rel (0) target = $region25
    $region24: #{tpu_custom_call.1} parent=1 // pred_region
      _
    $region25: #{tpu_custom_call.1} parent=1 // pred_fallthru
      _
    // Predicated region
    $region26: #{tpu_custom_call.1} parent=1 // pred_check
      _
    $region27: #{tpu_custom_call.1} parent=1 // pred_check_branch
      %47 = sbr.rel (0) target = $region29
    $region28: #{tpu_custom_call.1} parent=1 // pred_region
      %49 = vsyncadd [#allocation6], 0
      %s50 = sshll.u32 %s6, 4
      %s51 = int_to_ptr.hbm [resolvable:$true] %s50
      %s52 = sshll.u32 [#allocation5], 4
      %s53 = int_to_ptr.vmem [resolvable:$true] %s52
      %58 = dma.hbm_to_vmem [thread:$0]  %s51, 512, %s53, [#allocation6], 128, 128, 8
    $region29: #{tpu_custom_call.1} parent=1 // pred_fallthru
      _
    // Predicated region
    $region30: #{tpu_custom_call.1} parent=1 // pred_check
      _
    $region31: #{tpu_custom_call.1} parent=1 // pred_check_branch
      %60 = sbr.rel (0) target = $region33
    $region32: #{tpu_custom_call.1} parent=1 // pred_region
      _
    $region33: #{tpu_custom_call.1} parent=1 // pred_fallthru
      _
    // Predicated region
    $region34: #{tpu_custom_call.1} parent=1 // pred_check
      _
    $region35: #{tpu_custom_call.1} parent=1 // pred_check_branch
      %62 = sbr.rel (0) target = $region37
    $region36: #{tpu_custom_call.1} parent=1 // pred_region
      %64 = vsyncadd [#allocation6], 0
      %s65 = sshll.u32 %s8, 4
      %s66 = int_to_ptr.hbm [resolvable:$true] %s65
      %s67 = sshll.u32 [#allocation7], 4
      %s68 = int_to_ptr.vmem [resolvable:$true] %s67
      %73 = dma.hbm_to_vmem [thread:$0]  %s66, 512, %s68, [#allocation6], 128, 128, 8
    $region37: #{tpu_custom_call.1} parent=1 // pred_fallthru
      _
    // Predicated region
    $region38: #{tpu_custom_call.1} parent=1 // pred_check
      _
    $region39: #{tpu_custom_call.1} parent=1 // pred_check_branch
      %75 = sbr.rel (0) target = $region41
    $region40: #{tpu_custom_call.1} parent=1 // pred_region
      _
    $region41: #{tpu_custom_call.1} parent=1 // pred_fallthru
      _
    // Predicated region
    $region42: #{tpu_custom_call.1} parent=1 // pred_check
      _
    $region43: #{tpu_custom_call.1} parent=1 // pred_check_branch
      %77 = sbr.rel (0) target = $region45
    $region44: #{tpu_custom_call.1} parent=1 // pred_region
      %79 = vsyncadd [#allocation9], 0
      %s80 = sshll.u32 %s10, 4
      %s81 = int_to_ptr.hbm [resolvable:$true] %s80
      %s82 = sshll.u32 [#allocation8], 4
      %s83 = int_to_ptr.vmem [resolvable:$true] %s82
      %88 = dma.hbm_to_vmem [thread:$0]  %s81, 512, %s83, [#allocation9], 128, 128, 8
    $region45: #{tpu_custom_call.1} parent=1 // pred_fallthru
      _
    // Predicated region
    $region46: #{tpu_custom_call.1} parent=1 // pred_check
      _
    $region47: #{tpu_custom_call.1} parent=1 // pred_check_branch
      %90 = sbr.rel (0) target = $region49
    $region48: #{tpu_custom_call.1} parent=1 // pred_region
      _
    $region49: #{tpu_custom_call.1} parent=1 // pred_fallthru
      _
    // Predicated region
    $region50: #{tpu_custom_call.1} parent=1 // pred_check
      _
    $region51: #{tpu_custom_call.1} parent=1 // pred_check_branch
      %92 = sbr.rel (0) target = $region53
    $region52: #{tpu_custom_call.1} parent=1 // pred_region
      %94 = vsyncadd [#allocation9], 0
      %s95 = sshll.u32 %s12, 4
      %s96 = int_to_ptr.hbm [resolvable:$true] %s95
      %s97 = sshll.u32 [#allocation10], 4
      %s98 = int_to_ptr.vmem [resolvable:$true] %s97
      %103 = dma.hbm_to_vmem [thread:$0]  %s96, 512, %s98, [#allocation9], 128, 128, 8
    $region53: #{tpu_custom_call.1} parent=1 // pred_fallthru
      _
    // Predicated region
    $region54: #{tpu_custom_call.1} parent=1 // pred_check
      _
    $region55: #{tpu_custom_call.1} parent=1 // pred_check_branch
      %105 = sbr.rel (0) target = $region57
    $region56: #{tpu_custom_call.1} parent=1 // pred_region
      _
    $region57: #{tpu_custom_call.1} parent=1 // pred_fallthru
      _
    // Predicated region
    $region58: #{tpu_custom_call.1} parent=1 // pred_check
      _
    $region59: #{tpu_custom_call.1} parent=1 // pred_check_branch
      %107 = sbr.rel (0) target = $region61
    $region60: #{tpu_custom_call.1} parent=1 // pred_region
      _
    $region61: #{tpu_custom_call.1} parent=1 // pred_fallthru
      _
    // Predicated region
    $region62: #{tpu_custom_call.1} parent=1 // pred_check
      _
    $region63: #{tpu_custom_call.1} parent=1 // pred_check_branch
      %109 = sbr.rel (0) target = $region65
    $region64: #{tpu_custom_call.1} parent=1 // pred_region
      _
    $region65: #{tpu_custom_call.1} parent=1 // pred_fallthru
      _
    // Predicated region
    $region66: #{tpu_custom_call.1} parent=1 // pred_check
      _
    $region67: #{tpu_custom_call.1} parent=1 // pred_check_branch
      %111 = sbr.rel (0) target = $region69
    $region68: #{tpu_custom_call.1} parent=1 // pred_region
      %113 = dma.done [#allocation3], 64
    $region69: #{tpu_custom_call.1} parent=1 // pred_fallthru
      _
    // Predicated region
    $region70: #{tpu_custom_call.1} parent=1 // pred_check
      _
    $region71: #{tpu_custom_call.1} parent=1 // pred_check_branch
      %115 = sbr.rel (0) target = $region73
    $region72: #{tpu_custom_call.1} parent=1 // pred_region
      %117 = dma.done [#allocation6], 512
    $region73: #{tpu_custom_call.1} parent=1 // pred_fallthru
      _
    // Predicated region
    $region74: #{tpu_custom_call.1} parent=1 // pred_check
      _
    $region75: #{tpu_custom_call.1} parent=1 // pred_check_branch
      %119 = sbr.rel (0) target = $region77
    $region76: #{tpu_custom_call.1} parent=1 // pred_region
      %121 = dma.done [#allocation6], 512
    $region77: #{tpu_custom_call.1} parent=1 // pred_fallthru
      _
    // Predicated region
    $region78: #{tpu_custom_call.1} parent=1 // pred_check
      _
    $region79: #{tpu_custom_call.1} parent=1 // pred_check_branch
      %123 = sbr.rel (0) target = $region81
    $region80: #{tpu_custom_call.1} parent=1 // pred_region
      %125 = dma.done [#allocation9], 512
    $region81: #{tpu_custom_call.1} parent=1 // pred_fallthru
      _
    // Predicated region
    $region82: #{tpu_custom_call.1} parent=1 // pred_check
      _
    $region83: #{tpu_custom_call.1} parent=1 // pred_check_branch
      %127 = sbr.rel (0) target = $region85
    $region84: #{tpu_custom_call.1} parent=1 // pred_region
      %129 = dma.done [#allocation9], 512
    $region85: #{tpu_custom_call.1} parent=1 // pred_fallthru
      _
    %v130 = vld [vmem:[#allocation2] sm:$0xf]
    %v131 = vld [vmem:[%s2] sm:$0xff]
    %v132 = vld [vmem:[%s2 + $0x8] sm:$0xff]
    %v133 = vld [vmem:[%s3] sm:$0x1]
    %v135 = vperm.slane %v133, 0
    %vm137 = vcmask 130048
    %v139 = vsel %vm137, %v130, 0
    %141 = vmatpush.msra.mxu0 0.0
    %142 = vmatpush.msra.mxu0 0.0
    %143 = vmatpush.msra.mxu0 0.0
    %144 = vmatpush.msra.mxu0 0.0
    %145 = vmatpush.msra.mxu0 0.0
    %146 = vmatpush.msra.mxu0 0.0
    %147 = vmatpush.msra.mxu0 0.0
    %148 = vmatpush.msra.mxu0 0.0
    %149 = vmatpush.msra.mxu0 0.0
    %150 = vmatpush.msra.mxu0 0.0
    %151 = vmatpush.msra.mxu0 0.0
    %152 = vmatpush.msra.mxu0 0.0
    %153 = vmatpush.msra.mxu0 0.0
    %154 = vmatpush.msra.mxu0 0.0
    %155 = vmatpush.msra.mxu0 %v132
    %156 = vmatpush.msra.mxu0 %v131
    %157 = vmatmul.f32.gmra.mxu0 %v139
    %v158 = vpop.f32.mrf.mxu0
    %v159 = vadd.f32 %v135, %v158
    %160 = vdwg.mxu0
    %v161 = vmax.f32 %v159, 0.0
    %v162 = vld [vmem:[%s1] sm:$0x1]
    %v164 = vperm.slane %v162, 0
    %vm166 = vcmask 1043456
    %v167 = vsel %vm166, %v161, %v164
    %vm168 = vcmask 1044480
    %v169 = vsel %vm168, %v167, 0.0
    %v170 = vld [vmem:[%s4] sm:$0xff]
    %v171 = vld [vmem:[%s4 + $0x8] sm:$0xff]
    %v172 = vld [vmem:[%s4 + $0x10] sm:$0xff]
    %v173 = vld [vmem:[%s4 + $0x18] sm:$0xff]
    %v174 = vld [vmem:[%s5] sm:$0x1]
    %v176 = vperm.slane %v174, 0
    %vm178 = vcmask 261120
    %v180 = vsel %vm178, %v169, 0
    %182 = vmatpush.msra.mxu0 0.0
    %183 = vmatpush.msra.mxu0 0.0
    %184 = vmatpush.msra.mxu0 0.0
    %185 = vmatpush.msra.mxu0 0.0
    %186 = vmatpush.msra.mxu0 0.0
    %187 = vmatpush.msra.mxu0 0.0
    %188 = vmatpush.msra.mxu0 0.0
    %189 = vmatpush.msra.mxu0 0.0
    %190 = vmatpush.msra.mxu0 0.0
    %191 = vmatpush.msra.mxu0 0.0
    %192 = vmatpush.msra.mxu0 0.0
    %193 = vmatpush.msra.mxu0 0.0
    %194 = vmatpush.msra.mxu0 %v173
    %195 = vmatpush.msra.mxu0 %v172
    %196 = vmatpush.msra.mxu0 %v171
    %197 = vmatpush.msra.mxu0 %v170
    %198 = vmatmul.f32.gmra.mxu0 %v180
    %v199 = vpop.f32.mrf.mxu0
    %v200 = vadd.f32 %v176, %v199
    %201 = vdwg.mxu0
    %203 = vrot.lane.b32.xlu0 %v200, 96
    %v204 = vpop.permute.xlu0 %203
    %v205 = vsel %vm178, %v200, 0
    %v207 = vsel %vm178, %v204, 0
    %209 = vmatpush.xpose.msra.mxu0 0.0
    %210 = vmatpush.xpose.msra.mxu0 0.0
    %211 = vmatpush.xpose.msra.mxu0 0.0
    %212 = vmatpush.xpose.msra.mxu0 0.0
    %213 = vmatpush.xpose.msra.mxu0 0.0
    %214 = vmatpush.xpose.msra.mxu0 0.0
    %215 = vmatpush.xpose.msra.mxu0 0.0
    %216 = vmatpush.xpose.msra.mxu0 0.0
    %217 = vmatpush.xpose.msra.mxu0 0.0
    %218 = vmatpush.xpose.msra.mxu0 0.0
    %219 = vmatpush.xpose.msra.mxu0 0.0
    %220 = vmatpush.xpose.msra.mxu0 0.0
    %221 = vmatpush.xpose.msra.mxu0 0.0
    %222 = vmatpush.xpose.msra.mxu0 0.0
    %223 = vmatpush.xpose.msra.mxu0 0.0
    %224 = vmatpush.xpose.msra.mxu0 %v207
    %225 = vmatmul.f32.gmra.mxu0 %v205
    %v226 = vpop.f32.mrf.mxu0
    %v227 = vadd.f32 0.0, %v226
    %228 = vdwg.mxu0
    %v229 = vmul.f32 %v227, 0.17677669
    %v230 = vlaneseq
    %v231 = vand.u32 %v230, 127
    %vm232 = vcmp.le.s32.totalorder %v231, 4
    %v233 = vsel %vm232, %v229, -1e+30
    %vm234 = vcmask 64512
    %v235 = vsel %vm234, %v233, -inf
    %236 = vmax.xlane.f32.xlu0 %v235
    %v237 = vpop.xlane.xlu0 %236
    %v238 = vsub.f32 %v233, %v237
    %v239 = vmul.f32 %v238, 1.442695
    %v240 = vpow.pop %v239
    %v241 = vsel %vm234, %v240, 0.0
    %242 = vadd.xlane.f32.xlu0 %v241
    %v243 = vpop.xlane.xlu0 %242
    %v244 = vrcp.pop %v243
    %v245 = vmul.f32 %v243, %v244
    %v246 = vsub.f32 1.0, %v245
    %v247 = vmul.f32 %v244, %v246
    %v248 = vadd.f32 %v244, %v247
    %vm249 = vweird.f32 %v243
    %vm250 = vweird.f32 %v244
    %vm251 = vmor %vm249, %vm250
    %v252 = vsel %vm251, %v244, %v248
    %v253 = vand.u32 2147483647, %v243
    %vm254 = vcmp.eq.f32.partialorder %v253, 8.507059e+37
    %v255 = vand.u32 %v243, 2147483648
    %v256 = vor.u32 1.1754944e-38, %v255
    %v257 = vsel %vm254, %v256, %v252
    %v258 = vmul.f32 %v240, %v257
    %259 = vrot.lane.b32.xlu0 %v200, 64
    %v260 = vpop.permute.xlu0 %259
    %v263 = vsel %vm234, %v258, 0
    %265 = vmatpush.msra.mxu0 0.0
    %266 = vmatpush.msra.mxu0 0.0
    %267 = vmatpush.msra.mxu0 0.0
    %268 = vmatpush.msra.mxu0 0.0
    %269 = vmatpush.msra.mxu0 0.0
    %270 = vmatpush.msra.mxu0 0.0
    %271 = vmatpush.msra.mxu0 0.0
    %272 = vmatpush.msra.mxu0 0.0
    %273 = vmatpush.msra.mxu0 0.0
    %274 = vmatpush.msra.mxu0 0.0
    %275 = vmatpush.msra.mxu0 0.0
    %276 = vmatpush.msra.mxu0 0.0
    %277 = vmatpush.msra.mxu0 0.0
    %278 = vmatpush.msra.mxu0 0.0
    %279 = vmatpush.msra.mxu0 0.0
    %280 = vmatpush.msra.mxu0 %v260
    %281 = vmatmul.f32.gmra.mxu0 %v263
    %v282 = vpop.f32.mrf.mxu0
    %v283 = vadd.f32 0.0, %v282
    %284 = vdwg.mxu0
    %v285 = vld [vmem:[#allocation5] sm:$0xff]
    %v286 = vld [vmem:[#allocation5 + $0x8] sm:$0xff]
    %v287 = vld [vmem:[#allocation5 + $0x10] sm:$0xff]
    %v288 = vld [vmem:[#allocation5 + $0x18] sm:$0xff]
    %v289 = vld [vmem:[%s7] sm:$0x1]
    %v291 = vperm.slane %v289, 0
    %v294 = vsel %vm178, %v283, 0
    %296 = vmatpush.msra.mxu0 0.0
    %297 = vmatpush.msra.mxu0 0.0
    %298 = vmatpush.msra.mxu0 0.0
    %299 = vmatpush.msra.mxu0 0.0
    %300 = vmatpush.msra.mxu0 0.0
    %301 = vmatpush.msra.mxu0 0.0
    %302 = vmatpush.msra.mxu0 0.0
    %303 = vmatpush.msra.mxu0 0.0
    %304 = vmatpush.msra.mxu0 0.0
    %305 = vmatpush.msra.mxu0 0.0
    %306 = vmatpush.msra.mxu0 0.0
    %307 = vmatpush.msra.mxu0 0.0
    %308 = vmatpush.msra.mxu0 %v288
    %309 = vmatpush.msra.mxu0 %v287
    %310 = vmatpush.msra.mxu0 %v286
    %311 = vmatpush.msra.mxu0 %v285
    %312 = vmatmul.f32.gmra.mxu0 %v294
    %v313 = vpop.f32.mrf.mxu0
    %v314 = vadd.f32 %v291, %v313
    %315 = vdwg.mxu0
    %v316 = vadd.f32 %v169, %v314
    %v317 = vld [vmem:[#allocation7] sm:$0xff]
    %v318 = vld [vmem:[#allocation7 + $0x8] sm:$0xff]
    %v319 = vld [vmem:[#allocation7 + $0x10] sm:$0xff]
    %v320 = vld [vmem:[#allocation7 + $0x18] sm:$0xff]
    %v321 = vld [vmem:[%s9] sm:$0x1]
    %v323 = vperm.slane %v321, 0
    %v326 = vsel %vm178, %v316, 0
    %328 = vmatpush.msra.mxu0 0.0
    %329 = vmatpush.msra.mxu0 0.0
    %330 = vmatpush.msra.mxu0 0.0
    %331 = vmatpush.msra.mxu0 0.0
    %332 = vmatpush.msra.mxu0 0.0
    %333 = vmatpush.msra.mxu0 0.0
    %334 = vmatpush.msra.mxu0 0.0
    %335 = vmatpush.msra.mxu0 0.0
    %336 = vmatpush.msra.mxu0 0.0
    %337 = vmatpush.msra.mxu0 0.0
    %338 = vmatpush.msra.mxu0 0.0
    %339 = vmatpush.msra.mxu0 0.0
    %340 = vmatpush.msra.mxu0 %v320
    %341 = vmatpush.msra.mxu0 %v319
    %342 = vmatpush.msra.mxu0 %v318
    %343 = vmatpush.msra.mxu0 %v317
    %344 = vmatmul.f32.gmra.mxu0 %v326
    %v345 = vpop.f32.mrf.mxu0
    %v346 = vadd.f32 %v323, %v345
    %347 = vdwg.mxu0
    %v348 = vmax.f32 %v346, 0.0
    %v349 = vld [vmem:[#allocation8] sm:$0xff]
    %v350 = vld [vmem:[#allocation8 + $0x8] sm:$0xff]
    %v351 = vld [vmem:[#allocation8 + $0x10] sm:$0xff]
    %v352 = vld [vmem:[#allocation8 + $0x18] sm:$0xff]
    %v353 = vld [vmem:[%s11] sm:$0x1]
    %v355 = vperm.slane %v353, 0
    %v358 = vsel %vm178, %v348, 0
    %360 = vmatpush.msra.mxu0 0.0
    %361 = vmatpush.msra.mxu0 0.0
    %362 = vmatpush.msra.mxu0 0.0
    %363 = vmatpush.msra.mxu0 0.0
    %364 = vmatpush.msra.mxu0 0.0
    %365 = vmatpush.msra.mxu0 0.0
    %366 = vmatpush.msra.mxu0 0.0
    %367 = vmatpush.msra.mxu0 0.0
    %368 = vmatpush.msra.mxu0 0.0
    %369 = vmatpush.msra.mxu0 0.0
    %370 = vmatpush.msra.mxu0 0.0
    %371 = vmatpush.msra.mxu0 0.0
    %372 = vmatpush.msra.mxu0 %v352
    %373 = vmatpush.msra.mxu0 %v351
    %374 = vmatpush.msra.mxu0 %v350
    %375 = vmatpush.msra.mxu0 %v349
    %376 = vmatmul.f32.gmra.mxu0 %v358
    %v377 = vpop.f32.mrf.mxu0
    %v378 = vadd.f32 %v355, %v377
    %379 = vdwg.mxu0
    %v380 = vadd.f32 %v316, %v378
    %v381 = vmax.f32 %v380, 0.0
    %v382 = vld [vmem:[#allocation10] sm:$0xff]
    %v383 = vld [vmem:[#allocation10 + $0x8] sm:$0xff]
    %v384 = vld [vmem:[#allocation10 + $0x10] sm:$0xff]
    %v385 = vld [vmem:[#allocation10 + $0x18] sm:$0xff]
    %v386 = vld [vmem:[%s13] sm:$0x1]
    %v388 = vperm.slane %v386, 0
    %v391 = vsel %vm178, %v381, 0
    %393 = vmatpush.msra.mxu0 0.0
    %394 = vmatpush.msra.mxu0 0.0
    %395 = vmatpush.msra.mxu0 0.0
    %396 = vmatpush.msra.mxu0 0.0
    %397 = vmatpush.msra.mxu0 0.0
    %398 = vmatpush.msra.mxu0 0.0
    %399 = vmatpush.msra.mxu0 0.0
    %400 = vmatpush.msra.mxu0 0.0
    %401 = vmatpush.msra.mxu0 0.0
    %402 = vmatpush.msra.mxu0 0.0
    %403 = vmatpush.msra.mxu0 0.0
    %404 = vmatpush.msra.mxu0 0.0
    %405 = vmatpush.msra.mxu0 %v385
    %406 = vmatpush.msra.mxu0 %v384
    %407 = vmatpush.msra.mxu0 %v383
    %408 = vmatpush.msra.mxu0 %v382
    %409 = vmatmul.f32.gmra.mxu0 %v391
    %v410 = vpop.f32.mrf.mxu0
    %v411 = vadd.f32 %v388, %v410
    %412 = vdwg.mxu0
    %v413 = vmax.f32 %v411, 0.0
    %v414 = vld [vmem:[%s14] sm:$0xff]
    %v415 = vld [vmem:[%s14 + $0x8] sm:$0xff]
    %v416 = vld [vmem:[%s14 + $0x10] sm:$0xff]
    %v417 = vld [vmem:[%s14 + $0x18] sm:$0xff]
    %v418 = vld [vmem:[%s15] sm:$0x1]
    %v420 = vperm.slane %v418, 0
    %v423 = vsel %vm178, %v413, 0
    %425 = vmatpush.msra.mxu0 0.0
    %426 = vmatpush.msra.mxu0 0.0
    %427 = vmatpush.msra.mxu0 0.0
    %428 = vmatpush.msra.mxu0 0.0
    %429 = vmatpush.msra.mxu0 0.0
    %430 = vmatpush.msra.mxu0 0.0
    %431 = vmatpush.msra.mxu0 0.0
    %432 = vmatpush.msra.mxu0 0.0
    %433 = vmatpush.msra.mxu0 0.0
    %434 = vmatpush.msra.mxu0 0.0
    %435 = vmatpush.msra.mxu0 0.0
    %436 = vmatpush.msra.mxu0 0.0
    %437 = vmatpush.msra.mxu0 %v417
    %438 = vmatpush.msra.mxu0 %v416
    %439 = vmatpush.msra.mxu0 %v415
    %440 = vmatpush.msra.mxu0 %v414
    %441 = vmatmul.f32.gmra.mxu0 %v423
    %v442 = vpop.f32.mrf.mxu0
    %v443 = vadd.f32 %v420, %v442
    %444 = vdwg.mxu0
    %vm445 = vcmask 125952
    %446 = vst.msk [vmem:[#allocation11] sm:$0xf] %vm445, %v443
    // Predicated region
    $region86: #{tpu_custom_call.1} parent=1 // pred_check
      _
    $region87: #{tpu_custom_call.1} parent=1 // pred_check_branch
      %448 = sbr.rel (0) target = $region89
    $region88: #{tpu_custom_call.1} parent=1 // pred_region
      %450 = vsyncadd [#allocation4], 0
      %s452 = sshll.u32 [#allocation11], 4
      %s453 = int_to_ptr.vmem [resolvable:$true] %s452
      %s454 = sshll.u32 %s16, 4
      %s455 = int_to_ptr.hbm [resolvable:$true] %s454
      %457 = dma.vmem_to_hbm [thread:$0]  %s453, 64, %s455, [#allocation4]
    $region89: #{tpu_custom_call.1} parent=1 // pred_fallthru
      _
    // Predicated region
    $region90: #{tpu_custom_call.1} parent=1 // pred_check
      _
    $region91: #{tpu_custom_call.1} parent=1 // pred_check_branch
      %459 = sbr.rel (0) target = $region93
    $region92: #{tpu_custom_call.1} parent=1 // pred_region
      %461 = dma.done [#allocation4], 64
    $region93: #{tpu_custom_call.1} parent=1 // pred_fallthru
      _
    %462 = vsyncpa [#allocation3], 1
    %463 = vsyncpa [#allocation6], 1
    %464 = vsyncpa [#allocation9], 1
    %465 = vsyncpa [#allocation4], 1

</llo_original>
